<compile_context>
chip_gen: v5e
topology: v5e:2x2
jax: 0.10.0
libtpu: 0.0.40
codegen_flags: <defaults>
</compile_context>

<pallas_src>
import jax
import jax.numpy as jnp
from jax import lax
from jax.experimental import pallas as pl
from jax.experimental.pallas import tpu as pltpu


def linreg_forward(x, pos, batch, weight, bias, num_graphs, *,
                   tile_n=8192, num_cores=2, compute_dtype=jnp.float32):
    """Pallas implementation of LinReg.forward.

    x:      (N, atom_features)            node features
    pos:    (N, 3)                        node positions
    batch:  (N,) int32                    graph id per node (values in [0, num_graphs))
    weight: (out_dim, atom_features + 3)  PyTorch nn.Linear layout
    bias:   (out_dim,)
    returns (num_graphs * out_dim,) float32

    compute_dtype: leave at float32 unless the caller already holds bf16 inputs —
    a wrapper-side bf16 cast of f32 data is a full extra HBM pass and nets ~zero.
    Precondition (same as the PyTorch reference): every graph id owns >= 1 node,
    otherwise its mean divides by zero.
    """
    n, fa = x.shape
    p = pos.shape[1]
    o, f = weight.shape
    assert f == fa + p, (weight.shape, x.shape, pos.shape)
    fs = f + 1  # features + ones column (per-graph node counts)

    # Single wrapper copy pass: fold the concat and the counts column into one slab.
    slab = jnp.concatenate(
        [x.astype(compute_dtype), pos.astype(compute_dtype),
         jnp.ones((n, 1), compute_dtype)], axis=-1)            # (N, Fs)
    batch2d = batch.astype(jnp.int32).reshape(1, n)            # (1, N)

    # Node-tile size: as large as comfortably fits VMEM; per-step overhead dominates
    # small tiles.  tn is a multiple of 128 (lane-aligned (1, tn) batch block) unless
    # a single block covers all N (full-array blocks are always legal).
    if n <= tile_n:
        tn = n
        nb = 1
    else:
        tn = max(128, (int(tile_n) // 128) * 128)
        nb = -(-n // tn)                       # total node blocks
    nc = max(1, min(int(num_cores), nb))       # core-parallel partials
    spc = -(-nb // nc)                         # blocks per core (ceil)

    def kernel(slab_ref, batch_ref, out_ref):
        c = pl.program_id(0)                   # core / partial index ("parallel")
        s = pl.program_id(1)                   # node-tile step ("arbitrary")

        @pl.when(s == 0)
        def _init():
            out_ref[...] = jnp.zeros_like(out_ref)

        # Unclamped global block index -> global row offset.  Blocks past the end
        # (ragged tail, or duplicates from the clamped index_map) are zeroed here,
        # so garbage HBM/VMEM contents never reach the accumulator.
        blk = c * spc + s
        row0 = blk * tn
        rows = row0 + lax.broadcasted_iota(jnp.int32, (tn, 1), 0)
        tile = slab_ref[...]                                     # (TN, Fs)
        tile = jnp.where(rows < n, tile, jnp.zeros_like(tile))

        # One-hot graph membership for this tile only (G x TN).  Garbage batch ids
        # in the ragged tail are harmless: the matching slab rows are already zero.
        gid = lax.broadcasted_iota(jnp.int32, (num_graphs, tn), 0)
        mask = (batch_ref[...] == gid).astype(tile.dtype)        # (G, TN)

        # Per-graph sums of [x, pos, 1]: a single MXU push with K = TN,
        # independent of out_dim.  f32 accumulation in the resident output block.
        out_ref[...] += jnp.dot(mask, tile, preferred_element_type=jnp.float32)

    partials = pl.pallas_call(
        kernel,
        out_shape=jax.ShapeDtypeStruct((nc, num_graphs, fs), jnp.float32),
        grid_spec=pltpu.PrefetchScalarGridSpec(
            num_scalar_prefetch=0,
            grid=(nc, spc),
            in_specs=[
                # Clamp the block index so over-shooting (c, s) pairs re-read the
                # last valid block (their contribution is zeroed in-kernel).
                pl.BlockSpec((tn, fs),
                             lambda c, s: (jnp.minimum(c * spc + s, nb - 1), 0)),
                pl.BlockSpec((1, tn),
                             lambda c, s: (0, jnp.minimum(c * spc + s, nb - 1))),
            ],
            # One resident (G, Fs) accumulator block per core; written back once
            # per core.  (Lane-dense output tiling only matters once G*O grows.)
            out_specs=pl.BlockSpec((None, num_graphs, fs), lambda c, s: (c, 0, 0)),
        ),
        compiler_params=pltpu.CompilerParams(
            dimension_semantics=("parallel", "arbitrary"),
        ),
    )(slab, batch2d)

    # Tiny epilogue in plain JAX (G x Fs): combine per-core partials, divide by
    # counts, then apply the hoisted linear layer once on per-graph means.
    totals = partials.sum(axis=0)                     # (G, Fs) f32
    sums = totals[:, :f]                              # (G, F)
    cnt = totals[:, f:]                               # (G, 1)
    means = sums / cnt                                # empty graph -> inf/nan (matches ref)
    out = means @ weight.astype(jnp.float32).T + bias.astype(jnp.float32)  # (G, O)
    return out.reshape(-1)


if __name__ == "__main__":
    atom_features = 11
    out_dim = 1
    num_nodes = 300      # > one 128-row tile and not a multiple of 128:
    num_graphs = 2       # exercises tiling, ragged tail, clamped block, 2-way split.

    key = jax.random.PRNGKey(0)
    kx, kpos, kw, kb = jax.random.split(key, 4)

    x = jax.random.normal(kx, (num_nodes, atom_features), dtype=jnp.float32)
    pos = jax.random.normal(kpos, (num_nodes, 3), dtype=jnp.float32)
    # First 137 nodes -> graph 0, rest -> graph 1 (uneven counts on purpose).
    batch = jnp.where(jnp.arange(num_nodes) < 137, 0, 1).astype(jnp.int32)

    # Deterministic parameter init (mimics nn.Linear uniform init bounds).
    fan_in = atom_features + 3
    bound = 1.0 / jnp.sqrt(jnp.float32(fan_in))
    weight = jax.random.uniform(
        kw, (out_dim, fan_in), minval=-bound, maxval=bound, dtype=jnp.float32)
    bias = jax.random.uniform(
        kb, (out_dim,), minval=-bound, maxval=bound, dtype=jnp.float32)

    # Pure-JAX reference.
    inputs = jnp.concatenate([x, pos], axis=-1)
    y = inputs @ weight.T + bias
    ref = jnp.stack(
        [y[batch == g].mean(axis=0) for g in range(num_graphs)]).reshape(-1)

    # Multi-tile path: small tiles force ragged tail + clamped duplicate block +
    # 2-way core-parallel partials.
    out_tiled = linreg_forward(x, pos, batch, weight, bias, num_graphs,
                               tile_n=128, num_cores=2)
    jax.block_until_ready(out_tiled)
    assert jnp.allclose(out_tiled, ref, atol=1e-5, rtol=1e-5), (out_tiled, ref)

    # Default path: one full-array block (N <= tile_n), single partial.
    out_single = linreg_forward(x, pos, batch, weight, bias, num_graphs)
    jax.block_until_ready(out_single)
    assert jnp.allclose(out_single, ref, atol=1e-5, rtol=1e-5), (out_single, ref)

    print("KERNEL_OK")
</pallas_src>

<mosaic_0001>
module attributes {stable_mosaic.version = 11 : i64} {
  func.func @kernel(%arg0: i32, %arg1: i32, %arg2: memref<128x15xf32, #tpu.memory_space<vmem>>, %arg3: memref<1x128xi32, #tpu.memory_space<vmem>>, %arg4: memref<1x2x15xf32, #tpu.memory_space<vmem>>) attributes {dimension_semantics = [#tpu.dimension_semantics<parallel>, #tpu.dimension_semantics<arbitrary>], iteration_bounds = array<i64: 2, 2>, scalar_prefetch = 0 : i64, scratch_operands = 0 : i64, tpu.core_type = #tpu.core_type<tc>, window_params = [{transform_indices = @transform_0, window_bounds = array<i64: 128, 15>}, {transform_indices = @transform_1, window_bounds = array<i64: 1, 128>}, {transform_indices = @transform_2, window_bounds = array<i64: 1, 2, 15>}]} {
    %c0_i32 = arith.constant 0 : i32
    %0 = arith.cmpi eq, %arg1, %c0_i32 : i32
    %1 = arith.extui %0 : i1 to i32
    %c0_i32_0 = arith.constant 0 : i32
    %2 = arith.cmpi ne, %1, %c0_i32_0 : i32
    scf.if %2 {
      %cst_11 = arith.constant 0.000000e+00 : f32
      %29 = vector.broadcast %cst_11 : f32 to vector<2x15xf32>
      %c0_12 = arith.constant 0 : index
      %c0_13 = arith.constant 0 : index
      %c0_14 = arith.constant 0 : index
      %30 = vector.load %arg4[%c0_12, %c0_13, %c0_14] : memref<1x2x15xf32, #tpu.memory_space<vmem>>, vector<1x2x15xf32>
      %31 = vector.shape_cast %30 : vector<1x2x15xf32> to vector<2x15xf32>
      %32 = vector.shape_cast %29 : vector<2x15xf32> to vector<1x2x15xf32>
      tpu.vector_store %arg4[%c0_12, %c0_13, %c0_14], %32 {strides = array<i32>} : memref<1x2x15xf32, #tpu.memory_space<vmem>>, vector<1x2x15xf32>,
    } else {
    }
    %c2_i32 = arith.constant 2 : i32
    %3 = arith.muli %arg0, %c2_i32 : i32
    %4 = arith.addi %3, %arg1 : i32
    %c128_i32 = arith.constant 128 : i32
    %5 = arith.muli %4, %c128_i32 : i32
    %6 = tpu.iota {dimensions = array<i32: 0>} : vector<128x1xi32>
    %7 = vector.broadcast %5 : i32 to vector<128x1xi32>
    %8 = arith.addi %7, %6 : vector<128x1xi32>
    %c0 = arith.constant 0 : index
    %c0_1 = arith.constant 0 : index
    %9 = vector.load %arg2[%c0, %c0_1] : memref<128x15xf32, #tpu.memory_space<vmem>>, vector<128x15xf32>
    %c300_i32 = arith.constant 300 : i32
    %10 = vector.broadcast %c300_i32 : i32 to vector<128x1xi32>
    %11 = arith.cmpi slt, %8, %10 : vector<128x1xi32>
    %cst = arith.constant 0.000000e+00 : f32
    %12 = vector.broadcast %cst : f32 to vector<128x15xf32>
    %13 = vector.shape_cast %11 : vector<128x1xi1> to vector<128x1xi1>
    %14 = vector.broadcast %13 : vector<128x1xi1> to vector<128x15xi1>
    %15 = arith.select %14, %9, %12 : vector<128x15xi1>, vector<128x15xf32>
    %16 = tpu.iota {dimensions = array<i32: 0>} : vector<2x128xi32>
    %c0_2 = arith.constant 0 : index
    %c0_3 = arith.constant 0 : index
    %17 = vector.load %arg3[%c0_2, %c0_3] : memref<1x128xi32, #tpu.memory_space<vmem>>, vector<1x128xi32>
    %18 = vector.broadcast %17 : vector<1x128xi32> to vector<2x128xi32>
    %19 = arith.cmpi eq, %18, %16 : vector<2x128xi32>
    %20 = arith.extui %19 : vector<2x128xi1> to vector<2x128xi32>
    %21 = arith.sitofp %20 : vector<2x128xi32> to vector<2x128xf32>
    %c0_4 = arith.constant 0 : index
    %c0_5 = arith.constant 0 : index
    %c0_6 = arith.constant 0 : index
    %22 = vector.load %arg4[%c0_4, %c0_5, %c0_6] : memref<1x2x15xf32, #tpu.memory_space<vmem>>, vector<1x2x15xf32>
    %23 = vector.shape_cast %22 : vector<1x2x15xf32> to vector<2x15xf32>
    %cst_7 = arith.constant dense<0.000000e+00> : vector<2x15xf32>
    %24 = tpu.matmul %21, %15, %cst_7 {dimension_numbers = #tpu.dot_dimension_numbers<[1], [0], [0], [1], [0, 0, 1, 1], [], []>} : vector<2x128xf32>, vector<128x15xf32>, vector<2x15xf32> -> vector<2x15xf32>
    %25 = arith.addf %23, %24 : vector<2x15xf32>
    %c0_8 = arith.constant 0 : index
    %c0_9 = arith.constant 0 : index
    %c0_10 = arith.constant 0 : index
    %26 = vector.load %arg4[%c0_8, %c0_9, %c0_10] : memref<1x2x15xf32, #tpu.memory_space<vmem>>, vector<1x2x15xf32>
    %27 = vector.shape_cast %26 : vector<1x2x15xf32> to vector<2x15xf32>
    %28 = vector.shape_cast %25 : vector<2x15xf32> to vector<1x2x15xf32>
    tpu.vector_store %arg4[%c0_8, %c0_9, %c0_10], %28 {strides = array<i32>} : memref<1x2x15xf32, #tpu.memory_space<vmem>>, vector<1x2x15xf32>,
    return
  }
  func.func @transform_0(%arg0: i32, %arg1: i32) -> (i32, i32) {
    %c2_i32 = arith.constant 2 : i32
    %0 = arith.muli %arg0, %c2_i32 : i32
    %1 = arith.addi %0, %arg1 : i32
    %c2_i32_0 = arith.constant 2 : i32
    %2 = arith.minsi %1, %c2_i32_0 : i32
    %c0_i32 = arith.constant 0 : i32
    %c0_i32_1 = arith.constant 0 : i32
    return %2, %c0_i32 : i32, i32
  }
  func.func @transform_1(%arg0: i32, %arg1: i32) -> (i32, i32) {
    %c2_i32 = arith.constant 2 : i32
    %0 = arith.muli %arg0, %c2_i32 : i32
    %1 = arith.addi %0, %arg1 : i32
    %c2_i32_0 = arith.constant 2 : i32
    %2 = arith.minsi %1, %c2_i32_0 : i32
    %c0_i32 = arith.constant 0 : i32
    %c0_i32_1 = arith.constant 0 : i32
    return %c0_i32, %2 : i32, i32
  }
  func.func @transform_2(%arg0: i32, %arg1: i32) -> (i32, i32, i32) {
    %c0_i32 = arith.constant 0 : i32
    %c0_i32_0 = arith.constant 0 : i32
    %c0_i32_1 = arith.constant 0 : i32
    return %arg0, %c0_i32, %c0_i32_0 : i32, i32, i32
  }
}

</mosaic_0001>

<llo_original>
// kernel: tpu_custom_call.1
$region0: #{tpu_custom_call.1}
  #allocation0 [shape = 'u32[]', space=smem, size = 0x4, offset = 0x4, fixed_abs, tag = 'smem constant byte address 0x4 - core index']
  #allocation1 [shape = 'u32[72,128]{1,0:T(1,128)}', space=vmem, size = 0x9000, scoped, tag = 'internal scratch']
  %s0 = inlined_call_operand.vmem [shape: f32[300,15], index: 0, kind: input, shape index: {}]
  %s1 = inlined_call_operand.vmem [shape: s32[1,300], index: 1, kind: input, shape index: {}]
  %s2 = inlined_call_operand.hbm [shape: f32[2,2,15], index: 2, kind: output, shape index: {}]
  %s3 = sld [smem:[#allocation0]]
  $region45: #{tpu_custom_call.1} parent=0
    _
  %s5 = ssub.s32 1, %s3
  %s6 = scalar_select 0, %s5, %s3
  $region1: #{tpu_custom_call.1} parent=0
    #allocation2 [shape = 'u8[2048]{0}', space=vmem, size = 0x800, scoped, tag = 'output window, operand 0']
    #allocation3 [shape = 's32[2]{0}', space=sflag, size = 0x8, scoped, tag = 'scoped memory for tpu_custom_call.1']
    %7 = vsyncpa [#allocation3], 0
    %s8 = scalar_lea.sflag [#allocation3], 1
    %9 = vsyncpa %s8, 0
    loop: start=0, step=1, limit=6
    $region2: #{tpu_custom_call.1} parent=1 // loop_pre_header
      _
    $region3: #{tpu_custom_call.1} parent=1 // loop_header
      %s11 = sphi 0, %s15
      %p12 = scmp.ge.s32.totalorder %s11, 6
      %s18 = sphi 0, %s30
      %s19 = sphi 0, %s26
      %s20 = sphi 0, %s18
      %s21 = sphi 0, %s19
      %s22 = sphi 0, %s20
      %s23 = sphi 0, %s21
      %s41 = sphi 0, %s43
      %s44 = sphi 0, %s41
      %s45 = sphi 0, %s44
      %s61 = sphi 0, %s45
      %s75 = sphi 0, %s77
      %s78 = sphi 0, %s75
      %s79 = sphi 0, %s78
      %s95 = sphi 0, %s79
      %s101 = sphi 0, %s103
      %s104 = sphi 0, %s101
      %s105 = sphi 0, %s104
      %s121 = sphi 0, %s105
    $region4: #{tpu_custom_call.1} parent=1 // loop_header_branch
      %14 = sbr.rel (%p12) target = $region8
    $region5: #{tpu_custom_call.1} parent=1 // loop_body
      %s16 = ssub.s32 %s11, 1
      %s17 = ssub.s32 %s11, 2
      %s24 = sadd.s32 1, %s19
      %p25 = scmp.ge.s32.totalorder %s24, 2
      %s26 = scalar_select %p25, 0, %s24
      %s27 = sadd.s32 1, %s18
      %s28 = scalar_select %p25, %s27, %s18
      %p29 = scmp.ge.s32.totalorder %s28, 2
      %s30 = scalar_select %p29, 0, %s28
      %s31 = smul.u32 %s18, 2
      %s32 = sadd.s32 %s31, %s19
      %p33 = scmp.lt.s32.totalorder %s32, 2
      %s34 = scalar_select %p33, %s32, 2
      %s35 = smul.u32 %s30, 2
      %s36 = sadd.s32 %s35, %s26
      %p37 = scmp.lt.s32.totalorder %s36, 2
      %s38 = scalar_select %p37, %s36, 2
      %s39 = ssub.s32 %s34, %s38
      %p40 = scmp.eq.s32.totalorder %s39, 0
      %s42 = sadd.s32 %s41, 1
      %s43 = scalar_select %p40, %s41, %s42
      %p46 = pneg %p40
      %p47 = scmp.eq.s32.totalorder %s11, 3
      %p48 = por %p46, %p47
      %p49 = scmp.ne.s32.totalorder %s41, %s44
      %p50 = scmp.eq.s32.totalorder %s11, 0
      %p51 = por %p49, %p50
      %p52 = scmp.ne.s32.totalorder %s41, %s44
      %p53 = scmp.eq.s32.totalorder %s16, 3
      %p54 = por %p52, %p53
      %p55 = scmp.ne.s32.totalorder %s44, %s45
      %p56 = scmp.eq.s32.totalorder %s16, 0
      %p57 = por %p55, %p56
      %p58 = scmp.ne.s32.totalorder %s44, %s45
      %p59 = scmp.eq.s32.totalorder %s17, 3
      %p60 = por %p58, %p59
      %p62 = scmp.ne.s32.totalorder %s45, %s61
      %p63 = scmp.eq.s32.totalorder %s17, 0
      %p64 = por %p62, %p63
      %s65 = smul.u32 %s18, 2
      %s66 = sadd.s32 %s65, %s19
      %p67 = scmp.lt.s32.totalorder %s66, 2
      %s68 = scalar_select %p67, %s66, 2
      %s69 = smul.u32 %s30, 2
      %s70 = sadd.s32 %s69, %s26
      %p71 = scmp.lt.s32.totalorder %s70, 2
      %s72 = scalar_select %p71, %s70, 2
      %s73 = ssub.s32 %s68, %s72
      %p74 = scmp.eq.s32.totalorder %s73, 0
      %s76 = sadd.s32 %s75, 1
      %s77 = scalar_select %p74, %s75, %s76
      %p80 = pneg %p74
      %p81 = scmp.eq.s32.totalorder %s11, 3
      %p82 = por %p80, %p81
      %p83 = scmp.ne.s32.totalorder %s75, %s78
      %p84 = scmp.eq.s32.totalorder %s11, 0
      %p85 = por %p83, %p84
      %p86 = scmp.ne.s32.totalorder %s75, %s78
      %p87 = scmp.eq.s32.totalorder %s16, 3
      %p88 = por %p86, %p87
      %p89 = scmp.ne.s32.totalorder %s78, %s79
      %p90 = scmp.eq.s32.totalorder %s16, 0
      %p91 = por %p89, %p90
      %p92 = scmp.ne.s32.totalorder %s78, %s79
      %p93 = scmp.eq.s32.totalorder %s17, 3
      %p94 = por %p92, %p93
      %p96 = scmp.ne.s32.totalorder %s79, %s95
      %p97 = scmp.eq.s32.totalorder %s17, 0
      %p98 = por %p96, %p97
      %s99 = ssub.s32 %s18, %s30
      %p100 = scmp.eq.s32.totalorder %s99, 0
      %s102 = sadd.s32 %s101, 1
      %s103 = scalar_select %p100, %s101, %s102
      %p106 = pneg %p100
      %p107 = scmp.eq.s32.totalorder %s11, 3
      %p108 = por %p106, %p107
      %p109 = scmp.ne.s32.totalorder %s101, %s104
      %p110 = scmp.eq.s32.totalorder %s11, 0
      %p111 = por %p109, %p110
      %p112 = scmp.ne.s32.totalorder %s101, %s104
      %p113 = scmp.eq.s32.totalorder %s16, 3
      %p114 = por %p112, %p113
      %p115 = scmp.ne.s32.totalorder %s104, %s105
      %p116 = scmp.eq.s32.totalorder %s16, 0
      %p117 = por %p115, %p116
      %p118 = scmp.ne.s32.totalorder %s104, %s105
      %p119 = scmp.eq.s32.totalorder %s17, 3
      %p120 = por %p118, %p119
      %p122 = scmp.ne.s32.totalorder %s105, %s121
      %p123 = scmp.eq.s32.totalorder %s17, 0
      %p124 = por %p122, %p123
      %p125 = scmp.le.s32.totalorder 1, %s11
      %p126 = scmp.lt.s32.totalorder %s11, 5
      %p127 = pnand %p125, %p126
      %p128 = pneg %p127
      // Predicated region
      $region9: #{tpu_custom_call.1} parent=5 // pred_check
        _
      $region10: #{tpu_custom_call.1} parent=5 // pred_check_branch
        %130 = sbr.rel (%p127) target = $region12
      $region11: #{tpu_custom_call.1} parent=5 // pred_region
        %s131 = ssub.s32 %s11, 1
      $region12: #{tpu_custom_call.1} parent=5 // pred_fallthru
        _
      %p132 = scmp.lt.s32.totalorder %s11, 4
      // Predicated region
      $region13: #{tpu_custom_call.1} parent=5 // pred_check
        %p133 = pneg %p132
      $region14: #{tpu_custom_call.1} parent=5 // pred_check_branch
        %135 = sbr.rel (%p133) target = $region16
      $region15: #{tpu_custom_call.1} parent=5 // pred_region
        // Predicated region
        $region17: #{tpu_custom_call.1} parent=15 // pred_check
          %p136 = pneg %p51
        $region18: #{tpu_custom_call.1} parent=15 // pred_check_branch
          %138 = sbr.rel (%p136) target = $region20
        $region19: #{tpu_custom_call.1} parent=15 // pred_region
          %s139 = smul.u32 %s18, 2
          %s140 = sadd.s32 %s139, %s19
          %p141 = scmp.lt.s32.totalorder %s140, 2
          %s142 = scalar_select %p141, %s140, 2
          %s143 = smul.u32 16, %s142
          %s144 = ssub.s32 38, %s143
          %p145 = scmp.lt.s32.totalorder %s144, 16
          %s146 = scalar_select %p145, %s144, 16
          %s147 = smul.u32 8, %s146
          %p148 = scmp.lt.s32.totalorder %s143, 37
          %s149 = scalar_select %p148, %s143, 37
          %s150 = smul.addr %s149, 8
          %s151 = scalar_lea.vmem %s0, %s150
          %s152 = smul.u32 %s18, 2
          %s153 = sadd.s32 %s152, %s19
          %p154 = scmp.lt.s32.totalorder %s153, 2
          %s155 = scalar_select %p154, %s153, 2
          %s156 = smul.u32 16, %s155
          %s157 = ssub.s32 38, %s156
          %p158 = scmp.lt.s32.totalorder %s157, 16
          %s159 = scalar_select %p158, %s157, 16
          %s160 = smul.u32 8, %s159
        $region20: #{tpu_custom_call.1} parent=15 // pred_fallthru
          _
        // Predicated region
        $region21: #{tpu_custom_call.1} parent=15 // pred_check
          %p161 = pneg %p85
        $region22: #{tpu_custom_call.1} parent=15 // pred_check_branch
          %163 = sbr.rel (%p161) target = $region24
        $region23: #{tpu_custom_call.1} parent=15 // pred_region
          %s164 = smul.u32 %s18, 2
          %s165 = sadd.s32 %s164, %s19
          %p166 = scmp.lt.s32.totalorder %s165, 2
          %s167 = scalar_select %p166, %s165, 2
          %p168 = scmp.lt.s32.totalorder %s167, 2
          %s169 = scalar_select %p168, %s167, 2
          %s170 = scalar_lea.vmem %s1, %s169
          %s171 = smul.u32 %s18, 2
          %s172 = sadd.s32 %s171, %s19
          %p173 = scmp.lt.s32.totalorder %s172, 2
          %s174 = scalar_select %p173, %s172, 2
        $region24: #{tpu_custom_call.1} parent=15 // pred_fallthru
          _
      $region16: #{tpu_custom_call.1} parent=5 // pred_fallthru
        _
      %p175 = scmp.le.s32.totalorder 1, %s11
      %p176 = scmp.lt.s32.totalorder %s11, 5
      %p177 = pnand %p175, %p176
      %p178 = pneg %p177
      // Predicated region
      $region25: #{tpu_custom_call.1} parent=5 // pred_check
        _
      $region26: #{tpu_custom_call.1} parent=5 // pred_check_branch
        %180 = sbr.rel (%p177) target = $region28
      $region27: #{tpu_custom_call.1} parent=5 // pred_region
        %s181 = ssub.s32 %s11, 1
        %s182 = smul.u32 %s20, 2
        %s183 = sadd.s32 %s182, %s21
        %p184 = scmp.lt.s32.totalorder %s183, 2
        %s185 = scalar_select %p184, %s183, 2
        %s186 = smul.u32 16, %s185
        %s187 = ssub.s32 38, %s186
        %p188 = scmp.lt.s32.totalorder %s187, 16
        %s189 = scalar_select %p188, %s187, 16
        %s190 = smul.u32 8, %s189
        %p191 = scmp.lt.s32.totalorder %s186, 37
        %s192 = scalar_select %p191, %s186, 37
        %s193 = smul.addr %s192, 8
        %s194 = scalar_lea.vmem %s0, %s193
        %p195 = pneg %p57
        %p196 = pneg %p54
        %s197 = smul.u32 %s20, 2
        %s198 = sadd.s32 %s197, %s21
        %p199 = scmp.lt.s32.totalorder %s198, 2
        %s200 = scalar_select %p199, %s198, 2
        %p201 = scmp.lt.s32.totalorder %s200, 2
        %s202 = scalar_select %p201, %s200, 2
        %s203 = scalar_lea.vmem %s1, %s202
        %p204 = pneg %p91
        %p205 = pneg %p88
        %p206 = pneg %p117
        %p207 = pneg %p114
        %s208 = sand.u32 %s104, 1
        %s209 = scalar_lea.sflag [#allocation3], %s208
        %s210 = sand.u32 %s104, 1
        %s211 = smul.addr %s210, 2
        %s212 = scalar_lea.vmem [#allocation2], %s211
        %s213 = smul.u32 %s20, 2
        %s214 = sadd.s32 %s213, %s21
        %p215 = scmp.lt.s32.totalorder %s214, 2
        %s216 = scalar_select %p215, %s214, 2
        %s217 = smul.u32 16, %s216
        %s218 = ssub.s32 38, %s217
        %p219 = scmp.lt.s32.totalorder %s218, 16
        %s220 = scalar_select %p219, %s218, 16
        %s221 = smul.u32 8, %s220
        %p222 = scmp.lt.s32.totalorder %s217, 37
        %s223 = scalar_select %p222, %s217, 37
        %s224 = smul.addr %s223, 8
        %s225 = scalar_lea.vmem %s0, %s224
        %s226 = smul.u32 %s20, 2
        %s227 = sadd.s32 %s226, %s21
        %p228 = scmp.lt.s32.totalorder %s227, 2
        %s229 = scalar_select %p228, %s227, 2
        %s230 = smul.u32 16, %s229
        %s231 = ssub.s32 38, %s230
        %p232 = scmp.lt.s32.totalorder %s231, 16
        %s233 = scalar_select %p232, %s231, 16
        %s234 = smul.u32 8, %s233
        %s235 = smul.u32 %s20, 2
        %s236 = sadd.s32 %s235, %s21
        %p237 = scmp.lt.s32.totalorder %s236, 2
        %s238 = scalar_select %p237, %s236, 2
        %p239 = scmp.lt.s32.totalorder %s238, 2
        %s240 = scalar_select %p239, %s238, 2
        %s241 = scalar_lea.vmem %s1, %s240
        %s242 = smul.u32 %s20, 2
        %s243 = sadd.s32 %s242, %s21
        %p244 = scmp.lt.s32.totalorder %s243, 2
        %s245 = scalar_select %p244, %s243, 2
        %p246 = scmp.eq.s32.totalorder %s21, 0
        // Predicated region
        $region29: #{tpu_custom_call.1} parent=27 // pred_check
          %p247 = pneg %p246
        $region30: #{tpu_custom_call.1} parent=27 // pred_check_branch
          %249 = sbr.rel (%p247) target = $region32
        $region31: #{tpu_custom_call.1} parent=27 // pred_region
          %vm250 = vcmask 115712
          %251 = vst.msk [vmem:[%s212] sm:$0x3] %vm250, 0.0
        $region32: #{tpu_custom_call.1} parent=27 // pred_fallthru
          _
        %s252 = smul.u32 %s20, 2
        %s253 = sadd.s32 %s252, %s21
        %s254 = smul.u32 %s253, 128
        %v255 = vlaneseq
        %v256 = vshrl.u32 %v255, 7
        %v257 = vadd.s32 %v256, 8
        %v258 = vadd.s32 %v256, 16
        %v259 = vadd.s32 %v256, 24
        %v260 = vadd.s32 %v256, 32
        %v261 = vadd.s32 %v256, 40
        %v262 = vadd.s32 %v256, 48
        %v263 = vadd.s32 %v256, 56
        %v264 = vadd.s32 %v256, 64
        %v265 = vadd.s32 %v256, 72
        %v266 = vadd.s32 %v256, 80
        %v267 = vadd.s32 %v256, 88
        %v268 = vadd.s32 %v256, 96
        %v269 = vadd.s32 %v256, 104
        %v270 = vadd.s32 %v256, 112
        %v271 = vadd.s32 %v256, 120
        %v272 = vstv %s254
        %v273 = vadd.s32 %v272, %v256
        %v274 = vadd.s32 %v272, %v257
        %v275 = vadd.s32 %v272, %v258
        %v276 = vadd.s32 %v272, %v259
        %v277 = vadd.s32 %v272, %v260
        %v278 = vadd.s32 %v272, %v261
        %v279 = vadd.s32 %v272, %v262
        %v280 = vadd.s32 %v272, %v263
        %v281 = vadd.s32 %v272, %v264
        %v282 = vadd.s32 %v272, %v265
        %v283 = vadd.s32 %v272, %v266
        %v284 = vadd.s32 %v272, %v267
        %v285 = vadd.s32 %v272, %v268
        %v286 = vadd.s32 %v272, %v269
        %v287 = vadd.s32 %v272, %v270
        %v288 = vadd.s32 %v272, %v271
        %v289 = vld [vmem:[%s225] sm:$0xff]
        %v290 = vld [vmem:[%s225 + $0x8] sm:$0xff]
        %v291 = vld [vmem:[%s225 + $0x10] sm:$0xff]
        %v292 = vld [vmem:[%s225 + $0x18] sm:$0xff]
        %v293 = vld [vmem:[%s225 + $0x20] sm:$0xff]
        %v294 = vld [vmem:[%s225 + $0x28] sm:$0xff]
        %v295 = vld [vmem:[%s225 + $0x30] sm:$0xff]
        %v296 = vld [vmem:[%s225 + $0x38] sm:$0xff]
        %v297 = vld [vmem:[%s225 + $0x40] sm:$0xff]
        %v298 = vld [vmem:[%s225 + $0x48] sm:$0xff]
        %v299 = vld [vmem:[%s225 + $0x50] sm:$0xff]
        %v300 = vld [vmem:[%s225 + $0x58] sm:$0xff]
        %v301 = vld [vmem:[%s225 + $0x60] sm:$0xff]
        %v302 = vld [vmem:[%s225 + $0x68] sm:$0xff]
        %v303 = vld [vmem:[%s225 + $0x70] sm:$0xff]
        %v304 = vld [vmem:[%s225 + $0x78] sm:$0xff]
        %vm305 = vcmp.lt.s32.totalorder %v273, 300
        %vm306 = vcmp.lt.s32.totalorder %v274, 300
        %vm307 = vcmp.lt.s32.totalorder %v275, 300
        %vm308 = vcmp.lt.s32.totalorder %v276, 300
        %vm309 = vcmp.lt.s32.totalorder %v277, 300
        %vm310 = vcmp.lt.s32.totalorder %v278, 300
        %vm311 = vcmp.lt.s32.totalorder %v279, 300
        %vm312 = vcmp.lt.s32.totalorder %v280, 300
        %vm313 = vcmp.lt.s32.totalorder %v281, 300
        %vm314 = vcmp.lt.s32.totalorder %v282, 300
        %vm315 = vcmp.lt.s32.totalorder %v283, 300
        %vm316 = vcmp.lt.s32.totalorder %v284, 300
        %vm317 = vcmp.lt.s32.totalorder %v285, 300
        %vm318 = vcmp.lt.s32.totalorder %v286, 300
        %vm319 = vcmp.lt.s32.totalorder %v287, 300
        %vm320 = vcmp.lt.s32.totalorder %v288, 300
        %v321 = vsel %vm305, 1, 0
        %v322 = vsel %vm306, 1, 0
        %v323 = vsel %vm307, 1, 0
        %v324 = vsel %vm308, 1, 0
        %v325 = vsel %vm309, 1, 0
        %v326 = vsel %vm310, 1, 0
        %v327 = vsel %vm311, 1, 0
        %v328 = vsel %vm312, 1, 0
        %v329 = vsel %vm313, 1, 0
        %v330 = vsel %vm314, 1, 0
        %v331 = vsel %vm315, 1, 0
        %v332 = vsel %vm316, 1, 0
        %v333 = vsel %vm317, 1, 0
        %v334 = vsel %vm318, 1, 0
        %v335 = vsel %vm319, 1, 0
        %v336 = vsel %vm320, 1, 0
        %vm337 = vcmp.eq.s32.totalorder %v321, 1
        %vm338 = vcmp.eq.s32.totalorder %v322, 1
        %vm339 = vcmp.eq.s32.totalorder %v323, 1
        %vm340 = vcmp.eq.s32.totalorder %v324, 1
        %vm341 = vcmp.eq.s32.totalorder %v325, 1
        %vm342 = vcmp.eq.s32.totalorder %v326, 1
        %vm343 = vcmp.eq.s32.totalorder %v327, 1
        %vm344 = vcmp.eq.s32.totalorder %v328, 1
        %vm345 = vcmp.eq.s32.totalorder %v329, 1
        %vm346 = vcmp.eq.s32.totalorder %v330, 1
        %vm347 = vcmp.eq.s32.totalorder %v331, 1
        %vm348 = vcmp.eq.s32.totalorder %v332, 1
        %vm349 = vcmp.eq.s32.totalorder %v333, 1
        %vm350 = vcmp.eq.s32.totalorder %v334, 1
        %vm351 = vcmp.eq.s32.totalorder %v335, 1
        %vm352 = vcmp.eq.s32.totalorder %v336, 1
        %v353 = vsel %vm337, %v289, 0.0
        %v354 = vsel %vm338, %v290, 0.0
        %v355 = vsel %vm339, %v291, 0.0
        %v356 = vsel %vm340, %v292, 0.0
        %v357 = vsel %vm341, %v293, 0.0
        %v358 = vsel %vm342, %v294, 0.0
        %v359 = vsel %vm343, %v295, 0.0
        %v360 = vsel %vm344, %v296, 0.0
        %v361 = vsel %vm345, %v297, 0.0
        %v362 = vsel %vm346, %v298, 0.0
        %v363 = vsel %vm347, %v299, 0.0
        %v364 = vsel %vm348, %v300, 0.0
        %v365 = vsel %vm349, %v301, 0.0
        %v366 = vsel %vm350, %v302, 0.0
        %v367 = vsel %vm351, %v303, 0.0
        %v368 = vsel %vm352, %v304, 0.0
        %v369 = vld [vmem:[%s241] sm:$0x1]
        %v370 = vperm.slane %v369, 0
        %vm371 = vcmp.eq.s32.totalorder %v370, %v256
        %v372 = vsel %vm371, 1, 0
        %v373 = vcvt.s32.f32 %v372
        %v374 = vld [vmem:[%s212] sm:$0x3]
        %375 = vmatpush.msra.mxu0 %v368
        %376 = vmatpush.msra.mxu0 %v367
        %377 = vmatpush.msra.mxu0 %v366
        %378 = vmatpush.msra.mxu0 %v365
        %379 = vmatpush.msra.mxu0 %v364
        %380 = vmatpush.msra.mxu0 %v363
        %381 = vmatpush.msra.mxu0 %v362
        %382 = vmatpush.msra.mxu0 %v361
        %383 = vmatpush.msra.mxu0 %v360
        %384 = vmatpush.msra.mxu0 %v359
        %385 = vmatpush.msra.mxu0 %v358
        %386 = vmatpush.msra.mxu0 %v357
        %387 = vmatpush.msra.mxu0 %v356
        %388 = vmatpush.msra.mxu0 %v355
        %389 = vmatpush.msra.mxu0 %v354
        %390 = vmatpush.msra.mxu0 %v353
        %391 = vmatmul.f32.gmra.mxu0 %v373
        %v392 = vpop.f32.mrf.mxu0
        %v393 = vadd.f32 0.0, %v392
        %394 = vdwg.mxu0
        %v395 = vadd.f32 %v374, %v393
        %vm396 = vcmask 115712
        %397 = vst.msk [vmem:[%s212] sm:$0x3] %vm396, %v395
        %s398 = sand.u32 %s104, 1
        %s399 = scalar_lea.sflag [#allocation3], %s398
        %s400 = sand.u32 %s104, 1
        %s401 = smul.addr %s400, 2
        %s402 = scalar_lea.vmem [#allocation2], %s401
        // Predicated region
        $region33: #{tpu_custom_call.1} parent=27 // pred_check
          %p403 = pneg %p114
        $region34: #{tpu_custom_call.1} parent=27 // pred_check_branch
          %405 = sbr.rel (%p403) target = $region36
        $region35: #{tpu_custom_call.1} parent=27 // pred_region
          %407 = vsyncadd %s399, 0
          %s408 = smul.addr %s20, 2
          %s409 = scalar_lea.hbm %s2, %s408
          %s411 = sshll.u32 %s402, 4
          %s412 = int_to_ptr.vmem [resolvable:$true] %s411
          %s413 = sshll.u32 %s409, 4
          %s414 = int_to_ptr.hbm [resolvable:$true] %s413
          %416 = dma.vmem_to_hbm [thread:$0]  %s412, 32, %s414, %s399
        $region36: #{tpu_custom_call.1} parent=27 // pred_fallthru
          _
      $region28: #{tpu_custom_call.1} parent=5 // pred_fallthru
        _
      %p417 = scmp.le.s32.totalorder 2, %s11
      // Predicated region
      $region37: #{tpu_custom_call.1} parent=5 // pred_check
        %p418 = pneg %p417
      $region38: #{tpu_custom_call.1} parent=5 // pred_check_branch
        %420 = sbr.rel (%p418) target = $region40
      $region39: #{tpu_custom_call.1} parent=5 // pred_region
        %s421 = ssub.s32 %s11, 2
        // Predicated region
        $region41: #{tpu_custom_call.1} parent=39 // pred_check
          %p422 = pneg %p120
        $region42: #{tpu_custom_call.1} parent=39 // pred_check_branch
          %424 = sbr.rel (%p422) target = $region44
        $region43: #{tpu_custom_call.1} parent=39 // pred_region
          %s425 = sand.u32 %s105, 1
          %s426 = scalar_lea.sflag [#allocation3], %s425
          %s427 = sand.u32 %s105, 1
          %s428 = smul.addr %s427, 2
          %s429 = scalar_lea.vmem [#allocation2], %s428
          %431 = dma.done %s426, 32
        $region44: #{tpu_custom_call.1} parent=39 // pred_fallthru
          _
      $region40: #{tpu_custom_call.1} parent=5 // pred_fallthru
        _
    $region6: #{tpu_custom_call.1} parent=1 // loop_footer
      %s15 = sadd.s32 1, %s11
    $region7: #{tpu_custom_call.1} parent=1 // loop_footer_branch
      %10 = sbr.rel target = $region3
    $region8: #{tpu_custom_call.1} parent=1 // loop_exit
      _
    %432 = vsyncpa [#allocation3], 1
    %s433 = scalar_lea.sflag [#allocation3], 1
    %434 = vsyncpa %s433, 1

</llo_original>
